<compile_context>
chip_gen: v7x
topology: tpu7x:2x2x1
jax: 0.10.0
libtpu: 0.0.40
codegen_flags: <defaults>
</compile_context>

<pallas_src>
import functools

import jax
import jax.numpy as jnp
from jax import lax
from jax.experimental import pallas as pl
from jax.experimental.pallas import tpu as pltpu

_EPS = 1e-8  # matches torch F.cosine_similarity default eps


def _cdiv(a, b):
    return -(-a // b)


def _default_num_splits():
    try:
        kind = jax.devices()[0].device_kind.lower()
    except Exception:
        return 1
    # 2 TensorCores per chip on v7x (and megacore v4/v5p); 1 on v5e/v6e.
    return 2 if any(k in kind for k in ("v7", "v5p", "v4")) else 1


def _pick_pack(n, d):
    """Lane-dense pack factor p: view (N, d) as (N/p, p*d) when the reshape is free."""
    if d <= 128 and 128 % d == 0:
        p = 128 // d
        while p > 1 and n % p:
            p //= 2
        return p
    return 1


def _choose_tile_rows(n_rows, d2):
    """Rows per embeds block: ~4 MiB of f32 (lane-padded) VMEM, multiple of 8, <= 8192."""
    d2_pad = ((d2 + 127) // 128) * 128          # lane padding in VMEM
    rows = (4 * 1024 * 1024) // (d2_pad * 4)    # budget in f32 (in-kernel dtype)
    rows = max(8, min(8192, (rows // 8) * 8))
    n_rows_up = ((n_rows + 7) // 8) * 8
    return min(rows, max(8, n_rows_up))


def _embedding_criterion_kernel(nt2_ref, tbd_ref, ones_ref, embeds_ref,
                                out_ref, acc_ref,
                                *, n_rows, tile_rows, tiles_per_split, pack):
    s = pl.program_id(0)   # split (sharded across TensorCores where available)
    i = pl.program_id(1)   # tile within split (streaming reduction)

    @pl.when(i == 0)
    def _():
        acc_ref[...] = jnp.zeros_like(acc_ref)

    x = embeds_ref[...].astype(jnp.float32)                    # (tile_rows, D2)

    # Per-original-row dot(x, t) and sum(x^2) via block-diagonal MXU matvecs.
    dot = jnp.dot(x, tbd_ref[...], preferred_element_type=jnp.float32)      # (tile_rows, p)
    sumsq = jnp.dot(x * x, ones_ref[...], preferred_element_type=jnp.float32)

    nt2 = nt2_ref[0, 0]                                        # hoisted ||t||^2
    # cos = dot / max(||x||*||t||, eps) == dot * rsqrt(max(||x||^2*||t||^2, eps^2))
    cos = dot * lax.rsqrt(jnp.maximum(sumsq * nt2, _EPS * _EPS))

    # Mask packed rows beyond the true extent: ragged last tile and grid steps
    # whose index_map was clamped (UNclamped base => those rows are all masked).
    base = (s * tiles_per_split + i) * tile_rows
    row = base + lax.broadcasted_iota(jnp.int32, (tile_rows, pack), 0)
    contrib = jnp.where(row < n_rows, 1.0 - cos, 0.0)

    # One vreg-sized accumulator: sublane-reduce the tile, add once per step.
    acc_ref[...] += jnp.sum(contrib, axis=0, keepdims=True)    # (1, pack)

    @pl.when(i == pl.num_programs(1) - 1)
    def _():
        total = jnp.sum(acc_ref[...])
        out_ref[...] = jnp.full(out_ref.shape, total, dtype=out_ref.dtype)


def embedding_criterion(target, embeds, *, num_splits=None, tile_rows=None):
    """target: (D,) float, embeds: (N, D) float -> scalar float32 loss."""
    assert embeds.ndim == 2
    n, d = embeds.shape
    assert target.shape == (d,)

    if num_splits is None:
        num_splits = _default_num_splits()

    # Lane-dense packing (free reshape: rows are contiguous in HBM, no copy).
    p = _pick_pack(n, d)
    d2 = p * d
    n_rows = n // p
    embeds2 = embeds.reshape(n_rows, d2)

    if tile_rows is None:
        tile_rows = _choose_tile_rows(n_rows, d2)
    tiles_total = _cdiv(n_rows, tile_rows)
    num_splits = max(1, min(num_splits, tiles_total))
    tiles_per_split = _cdiv(tiles_total, num_splits)
    last_tile = tiles_total - 1

    # Loop-invariant ||target||^2, computed once and passed via SMEM.
    t32 = target.astype(jnp.float32)
    nt2 = jnp.sum(t32 * t32).reshape(1, 1)

    # Block-diagonal (D2, p) weights: recover the p per-original-row dots /
    # squared norms of each packed row with one MXU matvec each.
    eye = jnp.eye(p, dtype=jnp.float32)
    tbd = (eye[:, None, :] * t32[None, :, None]).reshape(d2, p)
    ones_bd = (eye[:, None, :] *
               jnp.ones((d,), jnp.float32)[None, :, None]).reshape(d2, p)

    def embeds_index(si, ii):
        # Clamp so DMAs stay in bounds; the kernel masks by the UNclamped row id.
        return (jnp.minimum(si * tiles_per_split + ii, last_tile), 0)

    kernel = functools.partial(
        _embedding_criterion_kernel,
        n_rows=n_rows, tile_rows=tile_rows,
        tiles_per_split=tiles_per_split, pack=p)

    itemsize = jnp.dtype(embeds.dtype).itemsize
    out = pl.pallas_call(
        kernel,
        out_shape=jax.ShapeDtypeStruct((num_splits, 8, 128), jnp.float32),
        grid=(num_splits, tiles_per_split),
        in_specs=[
            pl.BlockSpec(memory_space=pltpu.SMEM),                 # ||t||^2 scalar
            pl.BlockSpec((d2, p), lambda s, i: (0, 0)),            # block-diag target (resident)
            pl.BlockSpec((d2, p), lambda s, i: (0, 0)),            # block-diag ones (resident)
            pl.BlockSpec((tile_rows, d2), embeds_index),           # streaming embeds tiles
        ],
        out_specs=pl.BlockSpec((1, 8, 128), lambda s, i: (s, 0, 0)),  # per-split partial
        scratch_shapes=[pltpu.VMEM((1, p), jnp.float32)],             # tiny accumulator
        compiler_params=pltpu.CompilerParams(
            dimension_semantics=("parallel", "arbitrary"),
            vmem_limit_bytes=32 * 1024 * 1024),
        cost_estimate=pl.CostEstimate(
            flops=5 * n * d + 10 * n,
            transcendentals=n,
            bytes_accessed=n * d * itemsize + 2 * d2 * p * 4
                           + num_splits * 8 * 128 * 4),
    )(nt2, tbd, ones_bd, embeds2)

    partials = out[:, 0, 0]                       # (num_splits,) f32 partial sums
    return jnp.sum(partials) / jnp.float32(n)


def _reference(target, embeds):
    t = target.astype(jnp.float32)
    x = embeds.astype(jnp.float32)
    dot = jnp.sum(x * t[None, :], axis=-1)
    nx = jnp.linalg.norm(x, axis=-1)
    nt = jnp.linalg.norm(t)
    cos = dot / jnp.maximum(nx * nt, _EPS)
    return jnp.mean(1.0 - cos)


if __name__ == "__main__":
    key = jax.random.PRNGKey(0)
    k_t, k_e = jax.random.split(key)

    # Small shapes consistent with the module's forward (N embeddings of dim D).
    N, D = 8, 32
    target = jax.random.normal(k_t, (D,), dtype=jnp.float32)
    embeds = jax.random.normal(k_e, (N, D), dtype=jnp.float32)
    out = jax.block_until_ready(embedding_criterion(target, embeds))
    ref = _reference(target, embeds)
    assert jnp.allclose(out, ref, atol=1e-5, rtol=1e-5), (out, ref)

    # Multi-tile / multi-split path with a ragged last tile and a clamped
    # fully-out-of-range grid step (tiles_total=3 split over 2).
    k_t2, k_e2 = jax.random.split(jax.random.PRNGKey(0))
    N2, D2 = 72, 32
    target2 = jax.random.normal(k_t2, (D2,), dtype=jnp.float32)
    embeds2 = jax.random.normal(k_e2, (N2, D2), dtype=jnp.float32)
    out2 = jax.block_until_ready(
        embedding_criterion(target2, embeds2, num_splits=2, tile_rows=8))
    ref2 = _reference(target2, embeds2)
    assert jnp.allclose(out2, ref2, atol=1e-5, rtol=1e-5), (out2, ref2)

    # Odd N (no lane packing possible, p=1 fallback), f32 and bf16 ingest.
    k_t3, k_e3 = jax.random.split(jax.random.PRNGKey(1))
    N3, D3 = 101, 32
    target3 = jax.random.normal(k_t3, (D3,), dtype=jnp.float32)
    embeds3 = jax.random.normal(k_e3, (N3, D3), dtype=jnp.float32)
    out3 = jax.block_until_ready(embedding_criterion(target3, embeds3))
    ref3 = _reference(target3, embeds3)
    assert jnp.allclose(out3, ref3, atol=1e-5, rtol=1e-5), (out3, ref3)

    out4 = jax.block_until_ready(
        embedding_criterion(target3.astype(jnp.bfloat16),
                            embeds3.astype(jnp.bfloat16)))
    ref4 = _reference(target3.astype(jnp.bfloat16), embeds3.astype(jnp.bfloat16))
    assert jnp.allclose(out4, ref4, atol=1e-4, rtol=1e-4), (out4, ref4)

    print("KERNEL_OK")
</pallas_src>

<mosaic_0001>
module attributes {stable_mosaic.version = 11 : i64} {
  func.func @_embedding_criterion_kernel(%arg0: i32, %arg1: i32, %arg2: memref<1x1xf32, #tpu.memory_space<smem>>, %arg3: memref<128x4xf32, #tpu.memory_space<vmem>>, %arg4: memref<128x4xf32, #tpu.memory_space<vmem>>, %arg5: memref<8x128xf32, #tpu.memory_space<vmem>>, %arg6: memref<1x8x128xf32, #tpu.memory_space<vmem>>, %arg7: memref<1x4xf32, #tpu.memory_space<vmem>>) attributes {dimension_semantics = [#tpu.dimension_semantics<parallel>, #tpu.dimension_semantics<arbitrary>], iteration_bounds = array<i64: 1, 1>, scalar_prefetch = 0 : i64, scratch_operands = 1 : i64, tpu.core_type = #tpu.core_type<tc>, window_params = [{transform_indices = @transform_0, window_bounds = array<i64: 1, 1>}, {pipeline_mode = #tpu.pipeline_mode<synchronous>, transform_indices = @transform_1, window_bounds = array<i64: 128, 4>}, {pipeline_mode = #tpu.pipeline_mode<synchronous>, transform_indices = @transform_2, window_bounds = array<i64: 128, 4>}, {transform_indices = @transform_3, window_bounds = array<i64: 8, 128>}, {transform_indices = @transform_4, window_bounds = array<i64: 1, 8, 128>}]} {
    %c0_i32 = arith.constant 0 : i32
    %0 = arith.cmpi eq, %arg1, %c0_i32 : i32
    %1 = arith.extui %0 : i1 to i32
    %c0_i32_0 = arith.constant 0 : i32
    %2 = arith.cmpi ne, %1, %c0_i32_0 : i32
    scf.if %2 {
      %cst_19 = arith.constant 0.000000e+00 : f32
      %36 = vector.broadcast %cst_19 : f32 to vector<1x4xf32>
      %c0_20 = arith.constant 0 : index
      %c0_21 = arith.constant 0 : index
      %37 = vector.load %arg7[%c0_20, %c0_21] : memref<1x4xf32, #tpu.memory_space<vmem>>, vector<1x4xf32>
      tpu.vector_store %arg7[%c0_20, %c0_21], %36 {strides = array<i32>} : memref<1x4xf32, #tpu.memory_space<vmem>>, vector<1x4xf32>,
    } else {
    }
    %c0 = arith.constant 0 : index
    %c0_1 = arith.constant 0 : index
    %3 = vector.load %arg5[%c0, %c0_1] : memref<8x128xf32, #tpu.memory_space<vmem>>, vector<8x128xf32>
    %c0_2 = arith.constant 0 : index
    %c0_3 = arith.constant 0 : index
    %4 = vector.load %arg3[%c0_2, %c0_3] : memref<128x4xf32, #tpu.memory_space<vmem>>, vector<128x4xf32>
    %cst = arith.constant dense<0.000000e+00> : vector<8x4xf32>
    %5 = tpu.matmul %3, %4, %cst {dimension_numbers = #tpu.dot_dimension_numbers<[1], [0], [0], [1], [0, 0, 1, 1], [], []>} : vector<8x128xf32>, vector<128x4xf32>, vector<8x4xf32> -> vector<8x4xf32>
    %6 = arith.mulf %3, %3 : vector<8x128xf32>
    %c0_4 = arith.constant 0 : index
    %c0_5 = arith.constant 0 : index
    %7 = vector.load %arg4[%c0_4, %c0_5] : memref<128x4xf32, #tpu.memory_space<vmem>>, vector<128x4xf32>
    %cst_6 = arith.constant dense<0.000000e+00> : vector<8x4xf32>
    %8 = tpu.matmul %6, %7, %cst_6 {dimension_numbers = #tpu.dot_dimension_numbers<[1], [0], [0], [1], [0, 0, 1, 1], [], []>} : vector<8x128xf32>, vector<128x4xf32>, vector<8x4xf32> -> vector<8x4xf32>
    %c0_7 = arith.constant 0 : index
    %c0_8 = arith.constant 0 : index
    %9 = memref.load %arg2[%c0_7, %c0_8] : memref<1x1xf32, #tpu.memory_space<smem>>
    %10 = vector.broadcast %9 : f32 to vector<8x4xf32>
    %11 = arith.mulf %8, %10 : vector<8x4xf32>
    %cst_9 = arith.constant 1.000000e-16 : f32
    %12 = vector.broadcast %cst_9 : f32 to vector<8x4xf32>
    %13 = arith.maximumf %11, %12 : vector<8x4xf32>
    %14 = math.rsqrt %13 : vector<8x4xf32>
    %15 = arith.mulf %5, %14 : vector<8x4xf32>
    %c1_i32 = arith.constant 1 : i32
    %16 = arith.muli %arg0, %c1_i32 : i32
    %17 = arith.addi %16, %arg1 : i32
    %c8_i32 = arith.constant 8 : i32
    %18 = arith.muli %17, %c8_i32 : i32
    %19 = tpu.iota {dimensions = array<i32: 0>} : vector<8x4xi32>
    %20 = vector.broadcast %18 : i32 to vector<8x4xi32>
    %21 = arith.addi %20, %19 : vector<8x4xi32>
    %c2_i32 = arith.constant 2 : i32
    %22 = vector.broadcast %c2_i32 : i32 to vector<8x4xi32>
    %23 = arith.cmpi slt, %21, %22 : vector<8x4xi32>
    %cst_10 = arith.constant 1.000000e+00 : f32
    %24 = vector.broadcast %cst_10 : f32 to vector<8x4xf32>
    %25 = arith.subf %24, %15 : vector<8x4xf32>
    %cst_11 = arith.constant 0.000000e+00 : f32
    %26 = vector.broadcast %cst_11 : f32 to vector<8x4xf32>
    %27 = arith.select %23, %25, %26 : vector<8x4xi1>, vector<8x4xf32>
    %c0_12 = arith.constant 0 : index
    %c0_13 = arith.constant 0 : index
    %28 = vector.load %arg7[%c0_12, %c0_13] : memref<1x4xf32, #tpu.memory_space<vmem>>, vector<1x4xf32>
    %cst_14 = arith.constant dense<0.000000e+00> : vector<4xf32>
    %29 = vector.multi_reduction <add>, %27, %cst_14 [0] : vector<8x4xf32> to vector<4xf32>
    %30 = vector.shape_cast %29 : vector<4xf32> to vector<1x4xf32>
    %31 = arith.addf %28, %30 : vector<1x4xf32>
    %c0_15 = arith.constant 0 : index
    %c0_16 = arith.constant 0 : index
    %32 = vector.load %arg7[%c0_15, %c0_16] : memref<1x4xf32, #tpu.memory_space<vmem>>, vector<1x4xf32>
    tpu.vector_store %arg7[%c0_15, %c0_16], %31 {strides = array<i32>} : memref<1x4xf32, #tpu.memory_space<vmem>>, vector<1x4xf32>,
    %c0_i32_17 = arith.constant 0 : i32
    %33 = arith.cmpi eq, %arg1, %c0_i32_17 : i32
    %34 = arith.extui %33 : i1 to i32
    %c0_i32_18 = arith.constant 0 : i32
    %35 = arith.cmpi ne, %34, %c0_i32_18 : i32
    scf.if %35 {
      %c0_19 = arith.constant 0 : index
      %c0_20 = arith.constant 0 : index
      %36 = vector.load %arg7[%c0_19, %c0_20] : memref<1x4xf32, #tpu.memory_space<vmem>>, vector<1x4xf32>
      %37 = vector.shape_cast %36 : vector<1x4xf32> to vector<1x1x4xf32>
      %cst_21 = arith.constant dense<0.000000e+00> : vector<1xf32>
      %38 = vector.multi_reduction <add>, %37, %cst_21 [1, 2] : vector<1x1x4xf32> to vector<1xf32>
      %39 = vector.shape_cast %38 : vector<1xf32> to vector<1x1x1xf32>
      %40 = vector.extract %39[0, 0, 0] : f32 from vector<1x1x1xf32>
      %41 = vector.broadcast %40 : f32 to vector<1x8x128xf32>
      %c0_22 = arith.constant 0 : index
      %c0_23 = arith.constant 0 : index
      %c0_24 = arith.constant 0 : index
      %42 = vector.load %arg6[%c0_22, %c0_23, %c0_24] : memref<1x8x128xf32, #tpu.memory_space<vmem>>, vector<1x8x128xf32>
      tpu.vector_store %arg6[%c0_22, %c0_23, %c0_24], %41 {strides = array<i32>} : memref<1x8x128xf32, #tpu.memory_space<vmem>>, vector<1x8x128xf32>,
    } else {
    }
    return
  }
  func.func @transform_0(%arg0: i32, %arg1: i32) -> (i32, i32) {
    %c0_i32 = arith.constant 0 : i32
    %c0_i32_0 = arith.constant 0 : i32
    %c0_i32_1 = arith.constant 0 : i32
    return %c0_i32, %c0_i32_0 : i32, i32
  }
  func.func @transform_1(%arg0: i32, %arg1: i32) -> (i32, i32) {
    %c0_i32 = arith.constant 0 : i32
    %c0_i32_0 = arith.constant 0 : i32
    %c0_i32_1 = arith.constant 0 : i32
    return %c0_i32, %c0_i32_0 : i32, i32
  }
  func.func @transform_2(%arg0: i32, %arg1: i32) -> (i32, i32) {
    %c0_i32 = arith.constant 0 : i32
    %c0_i32_0 = arith.constant 0 : i32
    %c0_i32_1 = arith.constant 0 : i32
    return %c0_i32, %c0_i32_0 : i32, i32
  }
  func.func @transform_3(%arg0: i32, %arg1: i32) -> (i32, i32) {
    %c1_i32 = arith.constant 1 : i32
    %0 = arith.muli %arg0, %c1_i32 : i32
    %1 = arith.addi %0, %arg1 : i32
    %c0_i32 = arith.constant 0 : i32
    %2 = arith.minsi %1, %c0_i32 : i32
    %c0_i32_0 = arith.constant 0 : i32
    %c0_i32_1 = arith.constant 0 : i32
    return %2, %c0_i32_0 : i32, i32
  }
  func.func @transform_4(%arg0: i32, %arg1: i32) -> (i32, i32, i32) {
    %c0_i32 = arith.constant 0 : i32
    %c0_i32_0 = arith.constant 0 : i32
    %c0_i32_1 = arith.constant 0 : i32
    return %arg0, %c0_i32, %c0_i32_0 : i32, i32, i32
  }
}

</mosaic_0001>

<llo_original>
// kernel: tpu_custom_call.1
$region0: #{tpu_custom_call.1}
  #allocation0 [shape = 'u32[]', space=smem, size = 0x4, offset = 0x4, fixed_abs, tag = 'smem constant byte address 0x4 - core index']
  #allocation1 [shape = 'u32[144,128]{1,0:T(1,128)}', space=vmem, size = 0x12000, scoped, tag = 'internal scratch']
  #allocation2 [shape = 'f32[1,4]{1,0:T(1,128)}', space=vmem, size = 0x200, scoped, tag = 'scratch operand']
  #allocation3 [shape = 'f32[1,1]{1,0:T(1,128)S(6)}', space=smem, size = 0x200, scoped, tag = 'scoped memory for tpu_custom_call.1']
  %s0 = inlined_call_operand.<no memory space> [shape: f32[1,1], index: 0, kind: input, shape index: {}]
  %s1 = inlined_call_operand.vmem [shape: f32[128,4], index: 1, kind: input, shape index: {}]
  %s2 = inlined_call_operand.vmem [shape: f32[128,4], index: 2, kind: input, shape index: {}]
  %s3 = inlined_call_operand.vmem [shape: f32[2,128], index: 3, kind: input, shape index: {}]
  %s4 = inlined_call_operand.hbm [shape: f32[1,8,128], index: 4, kind: output, shape index: {}]
  %s5 = sld [smem:[#allocation0]]
  $region34: #{tpu_custom_call.1} parent=0
    _
  %s7 = ssub.s32 1, %s5
  %s8 = scalar_select 0, %s7, %s5
  %9 = sst [smem:[#allocation3]] %s0
  $region1: #{tpu_custom_call.1} parent=0
    #allocation4 [shape = 'u8[4096]{0}', space=vmem, size = 0x1000, scoped, tag = 'output window, operand 0, single buffered']
    #allocation5 [shape = 's32[1]{0}', space=sflag, size = 0x4, scoped, tag = 'scoped memory for tpu_custom_call.1']
    %10 = vsyncpa [#allocation5], 0
    // Predicated region
    $region2: #{tpu_custom_call.1} parent=1 // pred_check
      _
    $region3: #{tpu_custom_call.1} parent=1 // pred_check_branch
      %12 = sbr.rel (0) target = $region5
    $region4: #{tpu_custom_call.1} parent=1 // pred_region
      _
    $region5: #{tpu_custom_call.1} parent=1 // pred_fallthru
      _
    // Predicated region
    $region6: #{tpu_custom_call.1} parent=1 // pred_check
      _
    $region7: #{tpu_custom_call.1} parent=1 // pred_check_branch
      %14 = sbr.rel (0) target = $region9
    $region8: #{tpu_custom_call.1} parent=1 // pred_region
      _
    $region9: #{tpu_custom_call.1} parent=1 // pred_fallthru
      _
    // Predicated region
    $region10: #{tpu_custom_call.1} parent=1 // pred_check
      _
    $region11: #{tpu_custom_call.1} parent=1 // pred_check_branch
      %16 = sbr.rel (0) target = $region13
    $region12: #{tpu_custom_call.1} parent=1 // pred_region
      _
    $region13: #{tpu_custom_call.1} parent=1 // pred_fallthru
      _
    // Predicated region
    $region14: #{tpu_custom_call.1} parent=1 // pred_check
      _
    $region15: #{tpu_custom_call.1} parent=1 // pred_check_branch
      %18 = sbr.rel (0) target = $region17
    $region16: #{tpu_custom_call.1} parent=1 // pred_region
      %s19 = sadd.s32 0, 0
      %p20 = scmp.lt.s32.totalorder %s19, 0
      %s21 = scalar_select %p20, %s19, 0
      %s22 = smul.u32 4, %s21
      %s23 = ssub.s32 1, %s22
      %s24 = smul.u32 32, %s23
      %p25 = scmp.lt.s32.totalorder %s22, 0
      %s26 = scalar_select %p25, %s22, 0
      %s27 = smul.addr %s26, 2
      %s28 = scalar_lea.vmem %s3, %s27
      %s29 = sadd.s32 0, 0
      %p30 = scmp.lt.s32.totalorder %s29, 0
      %s31 = scalar_select %p30, %s29, 0
      %s32 = smul.u32 4, %s31
      %s33 = ssub.s32 1, %s32
      %s34 = smul.u32 32, %s33
    $region17: #{tpu_custom_call.1} parent=1 // pred_fallthru
      _
    %s35 = sadd.s32 0, 0
    %p36 = scmp.lt.s32.totalorder %s35, 0
    %s37 = scalar_select %p36, %s35, 0
    %s38 = smul.u32 4, %s37
    %s39 = ssub.s32 1, %s38
    %s40 = smul.u32 32, %s39
    %p41 = scmp.lt.s32.totalorder %s38, 0
    %s42 = scalar_select %p41, %s38, 0
    %s43 = smul.addr %s42, 2
    %s44 = scalar_lea.vmem %s3, %s43
    %s45 = sadd.s32 0, 0
    %p46 = scmp.lt.s32.totalorder %s45, 0
    %s47 = scalar_select %p46, %s45, 0
    %s48 = smul.u32 4, %s47
    %s49 = ssub.s32 1, %s48
    %s50 = smul.u32 32, %s49
    %p51 = scmp.lt.s32.totalorder %s48, 0
    %s52 = scalar_select %p51, %s48, 0
    %s53 = smul.addr %s52, 2
    %s54 = scalar_lea.vmem %s3, %s53
    %s55 = sadd.s32 0, 0
    %p56 = scmp.lt.s32.totalorder %s55, 0
    %s57 = scalar_select %p56, %s55, 0
    %s58 = smul.u32 4, %s57
    %s59 = ssub.s32 1, %s58
    %s60 = smul.u32 32, %s59
    %p61 = scmp.eq.s32.totalorder 0, 0
    // Predicated region
    $region18: #{tpu_custom_call.1} parent=1 // pred_check
      %p62 = pneg %p61
    $region19: #{tpu_custom_call.1} parent=1 // pred_check_branch
      %64 = sbr.rel (%p62) target = $region21
    $region20: #{tpu_custom_call.1} parent=1 // pred_region
      %vm65 = vcmask 24576
      %66 = vst.msk [vmem:[#allocation2] sm:$0x1] %vm65, 0.0
    $region21: #{tpu_custom_call.1} parent=1 // pred_fallthru
      _
    %v67 = vld [vmem:[%s54] sm:$0xff]
    %v68 = vld [vmem:[%s1] sm:$0xff]
    %v69 = vld [vmem:[%s1 + $0x8] sm:$0xff]
    %v70 = vld [vmem:[%s1 + $0x10] sm:$0xff]
    %v71 = vld [vmem:[%s1 + $0x18] sm:$0xff]
    %v72 = vld [vmem:[%s1 + $0x20] sm:$0xff]
    %v73 = vld [vmem:[%s1 + $0x28] sm:$0xff]
    %v74 = vld [vmem:[%s1 + $0x30] sm:$0xff]
    %v75 = vld [vmem:[%s1 + $0x38] sm:$0xff]
    %v76 = vld [vmem:[%s1 + $0x40] sm:$0xff]
    %v77 = vld [vmem:[%s1 + $0x48] sm:$0xff]
    %v78 = vld [vmem:[%s1 + $0x50] sm:$0xff]
    %v79 = vld [vmem:[%s1 + $0x58] sm:$0xff]
    %v80 = vld [vmem:[%s1 + $0x60] sm:$0xff]
    %v81 = vld [vmem:[%s1 + $0x68] sm:$0xff]
    %v82 = vld [vmem:[%s1 + $0x70] sm:$0xff]
    %v83 = vld [vmem:[%s1 + $0x78] sm:$0xff]
    %84 = vmatprep.subr.mxu0 0.0
    %85 = vmatpush1.msra.mxu0 %v68
    %86 = vmatprep.subr.mxu0 0.0
    %87 = vmatpush1.msra.mxu0 %v69
    %88 = vmatprep.subr.mxu0 0.0
    %89 = vmatpush1.msra.mxu0 %v70
    %90 = vmatprep.subr.mxu0 0.0
    %91 = vmatpush1.msra.mxu0 %v71
    %92 = vmatprep.subr.mxu0 0.0
    %93 = vmatpush1.msra.mxu0 %v72
    %94 = vmatprep.subr.mxu0 0.0
    %95 = vmatpush1.msra.mxu0 %v73
    %96 = vmatprep.subr.mxu0 0.0
    %97 = vmatpush1.msra.mxu0 %v74
    %98 = vmatprep.subr.mxu0 0.0
    %99 = vmatpush1.msra.mxu0 %v75
    %100 = vmatprep.subr.mxu0 0.0
    %101 = vmatpush1.msra.mxu0 %v76
    %102 = vmatprep.subr.mxu0 0.0
    %103 = vmatpush1.msra.mxu0 %v77
    %104 = vmatprep.subr.mxu0 0.0
    %105 = vmatpush1.msra.mxu0 %v78
    %106 = vmatprep.subr.mxu0 0.0
    %107 = vmatpush1.msra.mxu0 %v79
    %108 = vmatprep.subr.mxu0 0.0
    %109 = vmatpush1.msra.mxu0 %v80
    %110 = vmatprep.subr.mxu0 0.0
    %111 = vmatpush1.msra.mxu0 %v81
    %112 = vmatprep.subr.mxu0 0.0
    %113 = vmatpush1.msra.mxu0 %v82
    %114 = vmatprep.subr.mxu0 0.0
    %115 = vmatpush1.msra.mxu0 %v83
    %116 = vmatprep.subr.mxu0 0.0
    %117 = vmatpush1.msra.mxu0 0.0
    %118 = vmatprep.subr.mxu0 0.0
    %119 = vmatpush1.msra.mxu0 0.0
    %120 = vmatprep.subr.mxu0 0.0
    %121 = vmatpush1.msra.mxu0 0.0
    %122 = vmatprep.subr.mxu0 0.0
    %123 = vmatpush1.msra.mxu0 0.0
    %124 = vmatprep.subr.mxu0 0.0
    %125 = vmatpush1.msra.mxu0 0.0
    %126 = vmatprep.subr.mxu0 0.0
    %127 = vmatpush1.msra.mxu0 0.0
    %128 = vmatprep.subr.mxu0 0.0
    %129 = vmatpush1.msra.mxu0 0.0
    %130 = vmatprep.subr.mxu0 0.0
    %131 = vmatpush1.msra.mxu0 0.0
    %132 = vmatprep.subr.mxu0 0.0
    %133 = vmatpush1.msra.mxu0 0.0
    %134 = vmatprep.subr.mxu0 0.0
    %135 = vmatpush1.msra.mxu0 0.0
    %136 = vmatprep.subr.mxu0 0.0
    %137 = vmatpush1.msra.mxu0 0.0
    %138 = vmatprep.subr.mxu0 0.0
    %139 = vmatpush1.msra.mxu0 0.0
    %140 = vmatprep.subr.mxu0 0.0
    %141 = vmatpush1.msra.mxu0 0.0
    %142 = vmatprep.subr.mxu0 0.0
    %143 = vmatpush1.msra.mxu0 0.0
    %144 = vmatprep.subr.mxu0 0.0
    %145 = vmatpush1.msra.mxu0 0.0
    %146 = vmatprep.subr.mxu0 0.0
    %147 = vmatpush1.msra.mxu0 0.0
    %148 = vmatprep.mubr.f32.mxu0 0.0
    %149 = vmatmul.mubr.f32.gmra.mrb[0].mxu0 %v67
    %v150 = vpop.f32.mrb[0].mxu0
    %v151 = vadd.f32 0.0, %v150
    %v152 = vpop.f32.mrb[0].mxu0
    %153 = vdwg.mxu0
    %v154 = vmul.f32 %v67, %v67
    %v155 = vld [vmem:[%s2] sm:$0xff]
    %v156 = vld [vmem:[%s2 + $0x8] sm:$0xff]
    %v157 = vld [vmem:[%s2 + $0x10] sm:$0xff]
    %v158 = vld [vmem:[%s2 + $0x18] sm:$0xff]
    %v159 = vld [vmem:[%s2 + $0x20] sm:$0xff]
    %v160 = vld [vmem:[%s2 + $0x28] sm:$0xff]
    %v161 = vld [vmem:[%s2 + $0x30] sm:$0xff]
    %v162 = vld [vmem:[%s2 + $0x38] sm:$0xff]
    %v163 = vld [vmem:[%s2 + $0x40] sm:$0xff]
    %v164 = vld [vmem:[%s2 + $0x48] sm:$0xff]
    %v165 = vld [vmem:[%s2 + $0x50] sm:$0xff]
    %v166 = vld [vmem:[%s2 + $0x58] sm:$0xff]
    %v167 = vld [vmem:[%s2 + $0x60] sm:$0xff]
    %v168 = vld [vmem:[%s2 + $0x68] sm:$0xff]
    %v169 = vld [vmem:[%s2 + $0x70] sm:$0xff]
    %v170 = vld [vmem:[%s2 + $0x78] sm:$0xff]
    %171 = vmatprep.subr.mxu0 0.0
    %172 = vmatpush1.msra.mxu0 %v155
    %173 = vmatprep.subr.mxu0 0.0
    %174 = vmatpush1.msra.mxu0 %v156
    %175 = vmatprep.subr.mxu0 0.0
    %176 = vmatpush1.msra.mxu0 %v157
    %177 = vmatprep.subr.mxu0 0.0
    %178 = vmatpush1.msra.mxu0 %v158
    %179 = vmatprep.subr.mxu0 0.0
    %180 = vmatpush1.msra.mxu0 %v159
    %181 = vmatprep.subr.mxu0 0.0
    %182 = vmatpush1.msra.mxu0 %v160
    %183 = vmatprep.subr.mxu0 0.0
    %184 = vmatpush1.msra.mxu0 %v161
    %185 = vmatprep.subr.mxu0 0.0
    %186 = vmatpush1.msra.mxu0 %v162
    %187 = vmatprep.subr.mxu0 0.0
    %188 = vmatpush1.msra.mxu0 %v163
    %189 = vmatprep.subr.mxu0 0.0
    %190 = vmatpush1.msra.mxu0 %v164
    %191 = vmatprep.subr.mxu0 0.0
    %192 = vmatpush1.msra.mxu0 %v165
    %193 = vmatprep.subr.mxu0 0.0
    %194 = vmatpush1.msra.mxu0 %v166
    %195 = vmatprep.subr.mxu0 0.0
    %196 = vmatpush1.msra.mxu0 %v167
    %197 = vmatprep.subr.mxu0 0.0
    %198 = vmatpush1.msra.mxu0 %v168
    %199 = vmatprep.subr.mxu0 0.0
    %200 = vmatpush1.msra.mxu0 %v169
    %201 = vmatprep.subr.mxu0 0.0
    %202 = vmatpush1.msra.mxu0 %v170
    %203 = vmatprep.subr.mxu0 0.0
    %204 = vmatpush1.msra.mxu0 0.0
    %205 = vmatprep.subr.mxu0 0.0
    %206 = vmatpush1.msra.mxu0 0.0
    %207 = vmatprep.subr.mxu0 0.0
    %208 = vmatpush1.msra.mxu0 0.0
    %209 = vmatprep.subr.mxu0 0.0
    %210 = vmatpush1.msra.mxu0 0.0
    %211 = vmatprep.subr.mxu0 0.0
    %212 = vmatpush1.msra.mxu0 0.0
    %213 = vmatprep.subr.mxu0 0.0
    %214 = vmatpush1.msra.mxu0 0.0
    %215 = vmatprep.subr.mxu0 0.0
    %216 = vmatpush1.msra.mxu0 0.0
    %217 = vmatprep.subr.mxu0 0.0
    %218 = vmatpush1.msra.mxu0 0.0
    %219 = vmatprep.subr.mxu0 0.0
    %220 = vmatpush1.msra.mxu0 0.0
    %221 = vmatprep.subr.mxu0 0.0
    %222 = vmatpush1.msra.mxu0 0.0
    %223 = vmatprep.subr.mxu0 0.0
    %224 = vmatpush1.msra.mxu0 0.0
    %225 = vmatprep.subr.mxu0 0.0
    %226 = vmatpush1.msra.mxu0 0.0
    %227 = vmatprep.subr.mxu0 0.0
    %228 = vmatpush1.msra.mxu0 0.0
    %229 = vmatprep.subr.mxu0 0.0
    %230 = vmatpush1.msra.mxu0 0.0
    %231 = vmatprep.subr.mxu0 0.0
    %232 = vmatpush1.msra.mxu0 0.0
    %233 = vmatprep.subr.mxu0 0.0
    %234 = vmatpush1.msra.mxu0 0.0
    %235 = vmatprep.mubr.f32.mxu0 0.0
    %236 = vmatmul.mubr.f32.gmra.mrb[0].mxu0 %v154
    %v237 = vpop.f32.mrb[0].mxu0
    %v238 = vadd.f32 0.0, %v237
    %v239 = vpop.f32.mrb[0].mxu0
    %240 = vdwg.mxu0
    %s241 = sld [smem:[#allocation3]]
    %v242 = vstv %s241
    %v243 = vmul.f32 %v238, %v242
    %v244 = vmax.f32 %v243, 1e-16
    %v245 = vrsqrt.pop %v244
    %v246 = vmul.f32 %v151, %v245
    %s247 = sadd.s32 0, 0
    %s248 = smul.u32 %s247, 8
    %v249 = vlaneseq
    %v250 = vshrl.u32 %v249, 7
    %v251 = vstv %s248
    %v252 = vadd.s32 %v251, %v250
    %vm253 = vcmp.lt.s32.totalorder %v252, 2
    %v254 = vsub.f32 1.0, %v246
    %v255 = vsel %vm253, %v254, 0.0
    %v256 = vld [vmem:[#allocation2] sm:$0x1]
    %vm257 = vcmask 31744
    %v258 = vsel %vm257, %v255, 0.0
    %v259 = vrot.slane %v258, 4
    %v260 = vadd.f32 %v258, %v259
    %v261 = vrot.slane %v260, 2
    %v262 = vadd.f32 %v260, %v261
    %v263 = vrot.slane %v262, 1
    %v264 = vadd.f32 %v262, %v263
    %v265 = vadd.f32 %v256, %v264
    %vm266 = vcmask 24576
    %267 = vst.msk [vmem:[#allocation2] sm:$0x1] %vm266, %v265
    // Predicated region
    $region22: #{tpu_custom_call.1} parent=1 // pred_check
      %p268 = pneg %p61
    $region23: #{tpu_custom_call.1} parent=1 // pred_check_branch
      %270 = sbr.rel (%p268) target = $region25
    $region24: #{tpu_custom_call.1} parent=1 // pred_region
      %v271 = vld [vmem:[#allocation2] sm:$0x1]
      %v272 = vsel %vm266, %v271, 0.0
      %273 = vadd.xlane.f32.xlu0 %v272
      %v274 = vpop.xlane.xlu0 %273
      %v275 = vrot.slane %v274, 4
      %v276 = vadd.f32 %v274, %v275
      %v277 = vrot.slane %v276, 2
      %v278 = vadd.f32 %v276, %v277
      %v279 = vrot.slane %v278, 1
      %v280 = vadd.f32 %v278, %v279
      %s281 = vtos %v280
      %v282 = vstv %s281
      %283 = vst [vmem:[#allocation4] sm:$0xff] %v282
    $region25: #{tpu_custom_call.1} parent=1 // pred_fallthru
      _
    // Predicated region
    $region26: #{tpu_custom_call.1} parent=1 // pred_check
      _
    $region27: #{tpu_custom_call.1} parent=1 // pred_check_branch
      %285 = sbr.rel (0) target = $region29
    $region28: #{tpu_custom_call.1} parent=1 // pred_region
      %s287 = ssub.s32 128, 128
      %288 = vsyncadd [#allocation5], %s287
      %s290 = sshll.u32 [#allocation4], 4
      %s291 = int_to_ptr.vmem [resolvable:$true] %s290
      %293 = dma.vmem_to_hbm [thread:$0]  %s291, 128, %s4, [#allocation5]
    $region29: #{tpu_custom_call.1} parent=1 // pred_fallthru
      _
    // Predicated region
    $region30: #{tpu_custom_call.1} parent=1 // pred_check
      _
    $region31: #{tpu_custom_call.1} parent=1 // pred_check_branch
      %295 = sbr.rel (0) target = $region33
    $region32: #{tpu_custom_call.1} parent=1 // pred_region
      %296 = dma.done [#allocation5], 128
    $region33: #{tpu_custom_call.1} parent=1 // pred_fallthru
      _
    %297 = vsyncpa [#allocation5], 1

</llo_original>
